<compile_context>
chip_gen: v5e
topology: v5e:2x2
jax: 0.10.0
libtpu: 0.0.40
codegen_flags: <defaults>
</compile_context>

<pallas_src>
import functools

import jax
import jax.numpy as jnp
from jax.experimental import pallas as pl
from jax.experimental.pallas import tpu as pltpu

LN_EPS = 1e-5
_VMEM_BUDGET = 48 * 1024 * 1024  # leave headroom vs v7x's 64 MiB physical per-TC VMEM


def _round_up(a, m):
    return ((a + m - 1) // m) * m


def _round_down(a, m):
    return (a // m) * m


def _maybe_cast(a, dtype):
    return a if a.dtype == dtype else a.astype(dtype)


def _layernorm_relu(h, gamma, beta):
    """Fused LayerNorm (single statistics sweep) + ReLU, all in f32."""
    n = h.shape[-1]
    s1 = jnp.sum(h, axis=-1, keepdims=True)
    s2 = jnp.sum(h * h, axis=-1, keepdims=True)
    mu = s1 * (1.0 / n)
    var = jnp.maximum(s2 * (1.0 / n) - mu * mu, 0.0)
    hn = (h - mu) * jax.lax.rsqrt(var + LN_EPS) * gamma + beta
    return jnp.maximum(hn, 0.0)  # dropout (eval) = identity; ReLU fused here


def layernorm_net_kernel(
    x_ref,
    w1_ref, b1_ref, g1_ref, be1_ref,
    w2_ref, b2_ref, g2_ref, be2_ref,
    w3_ref, b3_ref,
    o_ref,
    *, matmul_dtype,
):
    # Weights already live in matmul_dtype (cast once in the wrapper, resident across
    # the grid). Activations are cast only when matmul_dtype != their dtype.
    x = _maybe_cast(x_ref[...], matmul_dtype)

    # fc1 -> ln1 -> (dropout: identity) -> relu
    h = jnp.dot(x, w1_ref[...], preferred_element_type=jnp.float32) + b1_ref[...]
    h = _layernorm_relu(h, g1_ref[...], be1_ref[...])

    # fc2 -> ln2 -> (dropout: identity) -> relu
    h = jnp.dot(_maybe_cast(h, matmul_dtype), w2_ref[...],
                preferred_element_type=jnp.float32) + b2_ref[...]
    h = _layernorm_relu(h, g2_ref[...], be2_ref[...])

    # fc3 (no transpose: output block is (tile, O) directly)
    out = jnp.dot(_maybe_cast(h, matmul_dtype), w3_ref[...],
                  preferred_element_type=jnp.float32) + b3_ref[...]
    o_ref[...] = out.astype(o_ref.dtype)


def _vmem_estimate(tile, E, H, O, x_itemsize, out_itemsize, w_itemsize):
    """Rough VMEM footprint: double-buffered batch-scaled I/O blocks, resident params,
    and ~6 live f32 activation slabs (h, h*h, normalized, cast copies, scratch)."""
    dbl = 2  # Pallas double-buffers pipelined operands
    io = dbl * (tile * E * x_itemsize + tile * O * out_itemsize)
    n_w = E * H + H * H + H * O
    n_small = 3 * H + 3 * H + O  # biases + LN gammas/betas
    params = dbl * (n_w * w_itemsize + n_small * 4)
    live = 6 * tile * H * 4
    return io + params + live


@functools.partial(jax.jit, static_argnames=("tile_m", "matmul_dtype"))
def layernorm_net(x, params, tile_m=2048, matmul_dtype=jnp.float32):
    """Fused LayerNormNet forward (eval mode).

    tile_m should be swept at production batch sizes (2048-8192 is a good range).
    matmul_dtype=jnp.bfloat16 only pays off when x/weights/outputs are bf16 in HBM
    end-to-end (v6e/v7x); keep f32 otherwise and always on v5e.
    """
    B, E = x.shape
    w1, b1, g1, be1, w2, b2, g2, be2, w3, b3 = params
    H = w1.shape[1]
    O = w3.shape[1]

    md = jnp.dtype(matmul_dtype)
    if w1.dtype != md:
        w1, w2, w3 = (w.astype(md) for w in (w1, w2, w3))  # cast once, not per step

    # Batch tile: as large as possible (amortize ~0.35us/step pipeline overhead), but
    # keep >= 2 grid steps once B is big enough so v7x's "parallel" axis can shard
    # tiles across both TensorCores and the input pipeline has something to prefetch.
    tile = min(tile_m, _round_up(B, 8))
    half = _round_down(B // 2, 128)
    if half >= 128:
        tile = min(tile, half)
    tile = max(8, _round_down(tile, 8))  # sublane (8) constraint on the batch dim
    grid = pl.cdiv(B, tile)              # ragged last block: Pallas masks the store

    # Explicit VMEM budgeting so a large tile never silently OOMs/spills on v7x.
    est = _vmem_estimate(tile, E, H, O, x.dtype.itemsize, x.dtype.itemsize,
                         md.itemsize)
    assert est < _VMEM_BUDGET, (
        f"tile_m={tile} needs ~{est} B of VMEM (> {_VMEM_BUDGET}); lower tile_m")
    vmem_limit = int(min(max(2 * est, 32 * 1024 * 1024), _VMEM_BUDGET))

    def full(shape):  # whole-array (non-batch-scaled) operand, same block every step
        return pl.BlockSpec(shape, lambda i: (0,) * len(shape))

    grid_spec = pltpu.PrefetchScalarGridSpec(
        num_scalar_prefetch=0,
        grid=(grid,),
        in_specs=[
            pl.BlockSpec((tile, E), lambda i: (i, 0)),  # x tile over batch rows
            full((E, H)), full((1, H)), full((1, H)), full((1, H)),
            full((H, H)), full((1, H)), full((1, H)), full((1, H)),
            full((H, O)), full((1, O)),
        ],
        # Output written untransposed; last dim O equals the full array dim so the
        # block is legal, and no wrapper-side transpose/pad HBM passes are needed.
        out_specs=pl.BlockSpec((tile, O), lambda i: (i, 0)),
    )

    out = pl.pallas_call(
        functools.partial(layernorm_net_kernel, matmul_dtype=md),
        out_shape=jax.ShapeDtypeStruct((B, O), x.dtype),
        grid_spec=grid_spec,
        compiler_params=pltpu.CompilerParams(
            dimension_semantics=("parallel",),  # shards batch tiles across v7x's 2 TCs
            vmem_limit_bytes=vmem_limit,
        ),
    )(x, w1, b1, g1, be1, w2, b2, g2, be2, w3, b3)

    return out


def init_params(key, embedding_dim, hidden_dim, out_dim):
    """Deterministic init mirroring nn.Linear / nn.LayerNorm parameter shapes.

    Linear weights are stored transposed: (in_features, out_features).
    Biases / LayerNorm params are (1, features) for TPU 2D layout friendliness.
    """
    ks = jax.random.split(key, 6)

    def linear(kw, kb, fan_in, fan_out):
        bound = 1.0 / jnp.sqrt(fan_in)
        w = jax.random.uniform(kw, (fan_in, fan_out), jnp.float32, -bound, bound)
        b = jax.random.uniform(kb, (1, fan_out), jnp.float32, -bound, bound)
        return w, b

    w1, b1 = linear(ks[0], ks[1], embedding_dim, hidden_dim)
    w2, b2 = linear(ks[2], ks[3], hidden_dim, hidden_dim)
    w3, b3 = linear(ks[4], ks[5], hidden_dim, out_dim)
    g1 = jnp.ones((1, hidden_dim), jnp.float32)
    be1 = jnp.zeros((1, hidden_dim), jnp.float32)
    g2 = jnp.ones((1, hidden_dim), jnp.float32)
    be2 = jnp.zeros((1, hidden_dim), jnp.float32)
    return (w1, b1, g1, be1, w2, b2, g2, be2, w3, b3)


def reference(x, params):
    """Pure-JAX reference (two-pass LayerNorm), eval-mode dropout (identity)."""
    w1, b1, g1, be1, w2, b2, g2, be2, w3, b3 = params

    def ln(h, g, b):
        mu = jnp.mean(h, axis=-1, keepdims=True)
        var = jnp.mean((h - mu) ** 2, axis=-1, keepdims=True)
        return (h - mu) / jnp.sqrt(var + LN_EPS) * g + b

    h = jnp.maximum(ln(x @ w1 + b1, g1, be1), 0.0)
    h = jnp.maximum(ln(h @ w2 + b2, g2, be2), 0.0)
    return h @ w3 + b3


if __name__ == "__main__":
    # NOTE: at these toy shapes the kernel is pure launch/DMA overhead; tile_m /
    # matmul_dtype decisions must be re-validated at production batch sizes with
    # xprof min-of-N.
    embedding_dim, hidden_dim, out_dim, drop_out = 32, 64, 16, 0.1

    key = jax.random.PRNGKey(0)
    kx, kp, kx2 = jax.random.split(key, 3)
    params = init_params(kp, embedding_dim, hidden_dim, out_dim)

    # 1) Small demo shape (single tile, grid of 1), f32 matmuls, strict check.
    B = 8
    x = jax.random.normal(kx, (B, embedding_dim), jnp.float32)
    out = jax.block_until_ready(layernorm_net(x, params))
    ref = reference(x, params)
    assert out.shape == (B, out_dim)
    assert jnp.allclose(out, ref, atol=1e-4, rtol=1e-4), "f32 mismatch vs reference"

    # 2) Multi-tile grid with a ragged last block (no wrapper-side pad or transpose).
    B2 = 300
    x2 = jax.random.normal(kx2, (B2, embedding_dim), jnp.float32)
    out2 = jax.block_until_ready(layernorm_net(x2, params))
    ref2 = reference(x2, params)
    assert out2.shape == (B2, out_dim)
    assert jnp.allclose(out2, ref2, atol=1e-4, rtol=1e-4), "ragged-batch mismatch"

    # 3) bf16 MXU operands (only worthwhile when bf16 reaches HBM end-to-end).
    out2_bf16 = jax.block_until_ready(
        layernorm_net(x2, params, matmul_dtype=jnp.bfloat16))
    assert jnp.allclose(out2_bf16, ref2, atol=1e-1, rtol=1e-1), "bf16 mismatch"

    print("KERNEL_OK")
</pallas_src>

<mosaic_0001>
module attributes {stable_mosaic.version = 11 : i64} {
  func.func @layernorm_net_kernel(%arg0: i32, %arg1: memref<8x32xf32, #tpu.memory_space<vmem>>, %arg2: memref<32x64xf32, #tpu.memory_space<vmem>>, %arg3: memref<1x64xf32, #tpu.memory_space<vmem>>, %arg4: memref<1x64xf32, #tpu.memory_space<vmem>>, %arg5: memref<1x64xf32, #tpu.memory_space<vmem>>, %arg6: memref<64x64xf32, #tpu.memory_space<vmem>>, %arg7: memref<1x64xf32, #tpu.memory_space<vmem>>, %arg8: memref<1x64xf32, #tpu.memory_space<vmem>>, %arg9: memref<1x64xf32, #tpu.memory_space<vmem>>, %arg10: memref<64x16xf32, #tpu.memory_space<vmem>>, %arg11: memref<1x16xf32, #tpu.memory_space<vmem>>, %arg12: memref<8x16xf32, #tpu.memory_space<vmem>>) attributes {dimension_semantics = [#tpu.dimension_semantics<parallel>], iteration_bounds = array<i64: 1>, scalar_prefetch = 0 : i64, scratch_operands = 0 : i64, tpu.core_type = #tpu.core_type<tc>, window_params = [{transform_indices = @transform_0, window_bounds = array<i64: 8, 32>}, {pipeline_mode = #tpu.pipeline_mode<synchronous>, transform_indices = @transform_1, window_bounds = array<i64: 32, 64>}, {pipeline_mode = #tpu.pipeline_mode<synchronous>, transform_indices = @transform_2, window_bounds = array<i64: 1, 64>}, {pipeline_mode = #tpu.pipeline_mode<synchronous>, transform_indices = @transform_3, window_bounds = array<i64: 1, 64>}, {pipeline_mode = #tpu.pipeline_mode<synchronous>, transform_indices = @transform_4, window_bounds = array<i64: 1, 64>}, {pipeline_mode = #tpu.pipeline_mode<synchronous>, transform_indices = @transform_5, window_bounds = array<i64: 64, 64>}, {pipeline_mode = #tpu.pipeline_mode<synchronous>, transform_indices = @transform_6, window_bounds = array<i64: 1, 64>}, {pipeline_mode = #tpu.pipeline_mode<synchronous>, transform_indices = @transform_7, window_bounds = array<i64: 1, 64>}, {pipeline_mode = #tpu.pipeline_mode<synchronous>, transform_indices = @transform_8, window_bounds = array<i64: 1, 64>}, {pipeline_mode = #tpu.pipeline_mode<synchronous>, transform_indices = @transform_9, window_bounds = array<i64: 64, 16>}, {pipeline_mode = #tpu.pipeline_mode<synchronous>, transform_indices = @transform_10, window_bounds = array<i64: 1, 16>}, {transform_indices = @transform_11, window_bounds = array<i64: 8, 16>}]} {
    %c0 = arith.constant 0 : index
    %c0_0 = arith.constant 0 : index
    %0 = vector.load %arg1[%c0, %c0_0] : memref<8x32xf32, #tpu.memory_space<vmem>>, vector<8x32xf32>
    %c0_1 = arith.constant 0 : index
    %c0_2 = arith.constant 0 : index
    %1 = vector.load %arg2[%c0_1, %c0_2] : memref<32x64xf32, #tpu.memory_space<vmem>>, vector<32x64xf32>
    %cst = arith.constant dense<0.000000e+00> : vector<8x64xf32>
    %2 = tpu.matmul %0, %1, %cst {dimension_numbers = #tpu.dot_dimension_numbers<[1], [0], [0], [1], [0, 0, 1, 1], [], []>} : vector<8x32xf32>, vector<32x64xf32>, vector<8x64xf32> -> vector<8x64xf32>
    %c0_3 = arith.constant 0 : index
    %c0_4 = arith.constant 0 : index
    %3 = vector.load %arg3[%c0_3, %c0_4] : memref<1x64xf32, #tpu.memory_space<vmem>>, vector<1x64xf32>
    %4 = vector.broadcast %3 : vector<1x64xf32> to vector<8x64xf32>
    %5 = arith.addf %2, %4 : vector<8x64xf32>
    %c0_5 = arith.constant 0 : index
    %c0_6 = arith.constant 0 : index
    %6 = vector.load %arg4[%c0_5, %c0_6] : memref<1x64xf32, #tpu.memory_space<vmem>>, vector<1x64xf32>
    %c0_7 = arith.constant 0 : index
    %c0_8 = arith.constant 0 : index
    %7 = vector.load %arg5[%c0_7, %c0_8] : memref<1x64xf32, #tpu.memory_space<vmem>>, vector<1x64xf32>
    %cst_9 = arith.constant dense<0.000000e+00> : vector<8xf32>
    %8 = vector.multi_reduction <add>, %5, %cst_9 [1] : vector<8x64xf32> to vector<8xf32>
    %9 = vector.shape_cast %8 : vector<8xf32> to vector<8x1xf32>
    %10 = arith.mulf %5, %5 : vector<8x64xf32>
    %cst_10 = arith.constant dense<0.000000e+00> : vector<8xf32>
    %11 = vector.multi_reduction <add>, %10, %cst_10 [1] : vector<8x64xf32> to vector<8xf32>
    %12 = vector.shape_cast %11 : vector<8xf32> to vector<8x1xf32>
    %cst_11 = arith.constant 1.562500e-02 : f32
    %13 = vector.broadcast %cst_11 : f32 to vector<8x1xf32>
    %14 = arith.mulf %9, %13 : vector<8x1xf32>
    %cst_12 = arith.constant 1.562500e-02 : f32
    %15 = vector.broadcast %cst_12 : f32 to vector<8x1xf32>
    %16 = arith.mulf %12, %15 : vector<8x1xf32>
    %17 = arith.mulf %14, %14 : vector<8x1xf32>
    %18 = arith.subf %16, %17 : vector<8x1xf32>
    %cst_13 = arith.constant 0.000000e+00 : f32
    %19 = vector.broadcast %cst_13 : f32 to vector<8x1xf32>
    %20 = arith.maximumf %18, %19 : vector<8x1xf32>
    %21 = vector.broadcast %14 : vector<8x1xf32> to vector<8x64xf32>
    %22 = arith.subf %5, %21 : vector<8x64xf32>
    %cst_14 = arith.constant 9.99999974E-6 : f32
    %23 = vector.broadcast %cst_14 : f32 to vector<8x1xf32>
    %24 = arith.addf %20, %23 : vector<8x1xf32>
    %25 = math.rsqrt %24 : vector<8x1xf32>
    %26 = vector.broadcast %25 : vector<8x1xf32> to vector<8x64xf32>
    %27 = arith.mulf %22, %26 : vector<8x64xf32>
    %28 = vector.broadcast %6 : vector<1x64xf32> to vector<8x64xf32>
    %29 = arith.mulf %27, %28 : vector<8x64xf32>
    %30 = vector.broadcast %7 : vector<1x64xf32> to vector<8x64xf32>
    %31 = arith.addf %29, %30 : vector<8x64xf32>
    %cst_15 = arith.constant 0.000000e+00 : f32
    %32 = vector.broadcast %cst_15 : f32 to vector<8x64xf32>
    %33 = arith.maximumf %31, %32 : vector<8x64xf32>
    %c0_16 = arith.constant 0 : index
    %c0_17 = arith.constant 0 : index
    %34 = vector.load %arg6[%c0_16, %c0_17] : memref<64x64xf32, #tpu.memory_space<vmem>>, vector<64x64xf32>
    %cst_18 = arith.constant dense<0.000000e+00> : vector<8x64xf32>
    %35 = tpu.matmul %33, %34, %cst_18 {dimension_numbers = #tpu.dot_dimension_numbers<[1], [0], [0], [1], [0, 0, 1, 1], [], []>} : vector<8x64xf32>, vector<64x64xf32>, vector<8x64xf32> -> vector<8x64xf32>
    %c0_19 = arith.constant 0 : index
    %c0_20 = arith.constant 0 : index
    %36 = vector.load %arg7[%c0_19, %c0_20] : memref<1x64xf32, #tpu.memory_space<vmem>>, vector<1x64xf32>
    %37 = vector.broadcast %36 : vector<1x64xf32> to vector<8x64xf32>
    %38 = arith.addf %35, %37 : vector<8x64xf32>
    %c0_21 = arith.constant 0 : index
    %c0_22 = arith.constant 0 : index
    %39 = vector.load %arg8[%c0_21, %c0_22] : memref<1x64xf32, #tpu.memory_space<vmem>>, vector<1x64xf32>
    %c0_23 = arith.constant 0 : index
    %c0_24 = arith.constant 0 : index
    %40 = vector.load %arg9[%c0_23, %c0_24] : memref<1x64xf32, #tpu.memory_space<vmem>>, vector<1x64xf32>
    %cst_25 = arith.constant dense<0.000000e+00> : vector<8xf32>
    %41 = vector.multi_reduction <add>, %38, %cst_25 [1] : vector<8x64xf32> to vector<8xf32>
    %42 = vector.shape_cast %41 : vector<8xf32> to vector<8x1xf32>
    %43 = arith.mulf %38, %38 : vector<8x64xf32>
    %cst_26 = arith.constant dense<0.000000e+00> : vector<8xf32>
    %44 = vector.multi_reduction <add>, %43, %cst_26 [1] : vector<8x64xf32> to vector<8xf32>
    %45 = vector.shape_cast %44 : vector<8xf32> to vector<8x1xf32>
    %cst_27 = arith.constant 1.562500e-02 : f32
    %46 = vector.broadcast %cst_27 : f32 to vector<8x1xf32>
    %47 = arith.mulf %42, %46 : vector<8x1xf32>
    %cst_28 = arith.constant 1.562500e-02 : f32
    %48 = vector.broadcast %cst_28 : f32 to vector<8x1xf32>
    %49 = arith.mulf %45, %48 : vector<8x1xf32>
    %50 = arith.mulf %47, %47 : vector<8x1xf32>
    %51 = arith.subf %49, %50 : vector<8x1xf32>
    %cst_29 = arith.constant 0.000000e+00 : f32
    %52 = vector.broadcast %cst_29 : f32 to vector<8x1xf32>
    %53 = arith.maximumf %51, %52 : vector<8x1xf32>
    %54 = vector.broadcast %47 : vector<8x1xf32> to vector<8x64xf32>
    %55 = arith.subf %38, %54 : vector<8x64xf32>
    %cst_30 = arith.constant 9.99999974E-6 : f32
    %56 = vector.broadcast %cst_30 : f32 to vector<8x1xf32>
    %57 = arith.addf %53, %56 : vector<8x1xf32>
    %58 = math.rsqrt %57 : vector<8x1xf32>
    %59 = vector.broadcast %58 : vector<8x1xf32> to vector<8x64xf32>
    %60 = arith.mulf %55, %59 : vector<8x64xf32>
    %61 = vector.broadcast %39 : vector<1x64xf32> to vector<8x64xf32>
    %62 = arith.mulf %60, %61 : vector<8x64xf32>
    %63 = vector.broadcast %40 : vector<1x64xf32> to vector<8x64xf32>
    %64 = arith.addf %62, %63 : vector<8x64xf32>
    %cst_31 = arith.constant 0.000000e+00 : f32
    %65 = vector.broadcast %cst_31 : f32 to vector<8x64xf32>
    %66 = arith.maximumf %64, %65 : vector<8x64xf32>
    %c0_32 = arith.constant 0 : index
    %c0_33 = arith.constant 0 : index
    %67 = vector.load %arg10[%c0_32, %c0_33] : memref<64x16xf32, #tpu.memory_space<vmem>>, vector<64x16xf32>
    %cst_34 = arith.constant dense<0.000000e+00> : vector<8x16xf32>
    %68 = tpu.matmul %66, %67, %cst_34 {dimension_numbers = #tpu.dot_dimension_numbers<[1], [0], [0], [1], [0, 0, 1, 1], [], []>} : vector<8x64xf32>, vector<64x16xf32>, vector<8x16xf32> -> vector<8x16xf32>
    %c0_35 = arith.constant 0 : index
    %c0_36 = arith.constant 0 : index
    %69 = vector.load %arg11[%c0_35, %c0_36] : memref<1x16xf32, #tpu.memory_space<vmem>>, vector<1x16xf32>
    %70 = vector.broadcast %69 : vector<1x16xf32> to vector<8x16xf32>
    %71 = arith.addf %68, %70 : vector<8x16xf32>
    %c0_37 = arith.constant 0 : index
    %c0_38 = arith.constant 0 : index
    %72 = vector.load %arg12[%c0_37, %c0_38] : memref<8x16xf32, #tpu.memory_space<vmem>>, vector<8x16xf32>
    tpu.vector_store %arg12[%c0_37, %c0_38], %71 {strides = array<i32>} : memref<8x16xf32, #tpu.memory_space<vmem>>, vector<8x16xf32>,
    return
  }
  func.func @transform_0(%arg0: i32) -> (i32, i32) {
    %c0_i32 = arith.constant 0 : i32
    %c0_i32_0 = arith.constant 0 : i32
    return %arg0, %c0_i32 : i32, i32
  }
  func.func @transform_1(%arg0: i32) -> (i32, i32) {
    %c0_i32 = arith.constant 0 : i32
    %c0_i32_0 = arith.constant 0 : i32
    %c0_i32_1 = arith.constant 0 : i32
    return %c0_i32, %c0_i32_0 : i32, i32
  }
  func.func @transform_2(%arg0: i32) -> (i32, i32) {
    %c0_i32 = arith.constant 0 : i32
    %c0_i32_0 = arith.constant 0 : i32
    %c0_i32_1 = arith.constant 0 : i32
    return %c0_i32, %c0_i32_0 : i32, i32
  }
  func.func @transform_3(%arg0: i32) -> (i32, i32) {
    %c0_i32 = arith.constant 0 : i32
    %c0_i32_0 = arith.constant 0 : i32
    %c0_i32_1 = arith.constant 0 : i32
    return %c0_i32, %c0_i32_0 : i32, i32
  }
  func.func @transform_4(%arg0: i32) -> (i32, i32) {
    %c0_i32 = arith.constant 0 : i32
    %c0_i32_0 = arith.constant 0 : i32
    %c0_i32_1 = arith.constant 0 : i32
    return %c0_i32, %c0_i32_0 : i32, i32
  }
  func.func @transform_5(%arg0: i32) -> (i32, i32) {
    %c0_i32 = arith.constant 0 : i32
    %c0_i32_0 = arith.constant 0 : i32
    %c0_i32_1 = arith.constant 0 : i32
    return %c0_i32, %c0_i32_0 : i32, i32
  }
  func.func @transform_6(%arg0: i32) -> (i32, i32) {
    %c0_i32 = arith.constant 0 : i32
    %c0_i32_0 = arith.constant 0 : i32
    %c0_i32_1 = arith.constant 0 : i32
    return %c0_i32, %c0_i32_0 : i32, i32
  }
  func.func @transform_7(%arg0: i32) -> (i32, i32) {
    %c0_i32 = arith.constant 0 : i32
    %c0_i32_0 = arith.constant 0 : i32
    %c0_i32_1 = arith.constant 0 : i32
    return %c0_i32, %c0_i32_0 : i32, i32
  }
  func.func @transform_8(%arg0: i32) -> (i32, i32) {
    %c0_i32 = arith.constant 0 : i32
    %c0_i32_0 = arith.constant 0 : i32
    %c0_i32_1 = arith.constant 0 : i32
    return %c0_i32, %c0_i32_0 : i32, i32
  }
  func.func @transform_9(%arg0: i32) -> (i32, i32) {
    %c0_i32 = arith.constant 0 : i32
    %c0_i32_0 = arith.constant 0 : i32
    %c0_i32_1 = arith.constant 0 : i32
    return %c0_i32, %c0_i32_0 : i32, i32
  }
  func.func @transform_10(%arg0: i32) -> (i32, i32) {
    %c0_i32 = arith.constant 0 : i32
    %c0_i32_0 = arith.constant 0 : i32
    %c0_i32_1 = arith.constant 0 : i32
    return %c0_i32, %c0_i32_0 : i32, i32
  }
  func.func @transform_11(%arg0: i32) -> (i32, i32) {
    %c0_i32 = arith.constant 0 : i32
    %c0_i32_0 = arith.constant 0 : i32
    return %arg0, %c0_i32 : i32, i32
  }
}

</mosaic_0001>

<llo_original>
// kernel: layernorm_net.1
$region0: #{layernorm_net.1}
  #allocation0 [shape = 'u32[]', space=smem, size = 0x4, offset = 0x4, fixed_abs, tag = 'smem constant byte address 0x4 - core index']
  #allocation1 [shape = 'u32[72,128]{1,0:T(1,128)}', space=vmem, size = 0x9000, scoped, tag = 'internal scratch']
  %s0 = inlined_call_operand.vmem [shape: f32[8,32], index: 0, kind: input, shape index: {}]
  %s1 = inlined_call_operand.hbm [shape: f32[32,64], index: 1, kind: input, shape index: {}]
  %s2 = inlined_call_operand.vmem [shape: f32[1,64], index: 2, kind: input, shape index: {}]
  %s3 = inlined_call_operand.vmem [shape: f32[1,64], index: 3, kind: input, shape index: {}]
  %s4 = inlined_call_operand.vmem [shape: f32[1,64], index: 4, kind: input, shape index: {}]
  %s5 = inlined_call_operand.vmem [shape: f32[64,64], index: 5, kind: input, shape index: {}]
  %s6 = inlined_call_operand.vmem [shape: f32[1,64], index: 6, kind: input, shape index: {}]
  %s7 = inlined_call_operand.vmem [shape: f32[1,64], index: 7, kind: input, shape index: {}]
  %s8 = inlined_call_operand.vmem [shape: f32[1,64], index: 8, kind: input, shape index: {}]
  %s9 = inlined_call_operand.vmem [shape: f32[64,16], index: 9, kind: input, shape index: {}]
  %s10 = inlined_call_operand.vmem [shape: f32[1,16], index: 10, kind: input, shape index: {}]
  %s11 = inlined_call_operand.hbm [shape: f32[8,16], index: 11, kind: output, shape index: {}]
  %s12 = sld [smem:[#allocation0]]
  $region58: #{layernorm_net.1} parent=0
    _
  %s14 = ssub.s32 1, %s12
  %s15 = scalar_select 0, %s14, %s12
  $region1: #{layernorm_net.1} parent=0
    #allocation2 [shape = 'u8[16384]{0}', space=vmem, size = 0x4000, scoped, tag = 'input window, operand 1, single buffered']
    #allocation3 [shape = 's32[1]{0}', space=sflag, size = 0x4, scoped, tag = 'scoped memory for layernorm_net.1']
    #allocation4 [shape = 's32[1]{0}', space=sflag, size = 0x4, scoped, tag = 'scoped memory for layernorm_net.1']
    #allocation5 [shape = 'u8[4096]{0}', space=vmem, size = 0x1000, scoped, tag = 'output window, operand 0, single buffered']
    %16 = vsyncpa [#allocation3], 0
    %17 = vsyncpa [#allocation4], 0
    // Predicated region
    $region2: #{layernorm_net.1} parent=1 // pred_check
      _
    $region3: #{layernorm_net.1} parent=1 // pred_check_branch
      %19 = sbr.rel (0) target = $region5
    $region4: #{layernorm_net.1} parent=1 // pred_region
      _
    $region5: #{layernorm_net.1} parent=1 // pred_fallthru
      _
    // Predicated region
    $region6: #{layernorm_net.1} parent=1 // pred_check
      _
    $region7: #{layernorm_net.1} parent=1 // pred_check_branch
      %21 = sbr.rel (0) target = $region9
    $region8: #{layernorm_net.1} parent=1 // pred_region
      %23 = vsyncadd [#allocation3], 0
      %s24 = sshll.u32 %s1, 4
      %s25 = int_to_ptr.hbm [resolvable:$true] %s24
      %s26 = sshll.u32 [#allocation2], 4
      %s27 = int_to_ptr.vmem [resolvable:$true] %s26
      %32 = dma.hbm_to_vmem [thread:$0]  %s25, 512, %s27, [#allocation3], 128, 128, 8
    $region9: #{layernorm_net.1} parent=1 // pred_fallthru
      _
    // Predicated region
    $region10: #{layernorm_net.1} parent=1 // pred_check
      _
    $region11: #{layernorm_net.1} parent=1 // pred_check_branch
      %34 = sbr.rel (0) target = $region13
    $region12: #{layernorm_net.1} parent=1 // pred_region
      _
    $region13: #{layernorm_net.1} parent=1 // pred_fallthru
      _
    // Predicated region
    $region14: #{layernorm_net.1} parent=1 // pred_check
      _
    $region15: #{layernorm_net.1} parent=1 // pred_check_branch
      %36 = sbr.rel (0) target = $region17
    $region16: #{layernorm_net.1} parent=1 // pred_region
      _
    $region17: #{layernorm_net.1} parent=1 // pred_fallthru
      _
    // Predicated region
    $region18: #{layernorm_net.1} parent=1 // pred_check
      _
    $region19: #{layernorm_net.1} parent=1 // pred_check_branch
      %38 = sbr.rel (0) target = $region21
    $region20: #{layernorm_net.1} parent=1 // pred_region
      _
    $region21: #{layernorm_net.1} parent=1 // pred_fallthru
      _
    // Predicated region
    $region22: #{layernorm_net.1} parent=1 // pred_check
      _
    $region23: #{layernorm_net.1} parent=1 // pred_check_branch
      %40 = sbr.rel (0) target = $region25
    $region24: #{layernorm_net.1} parent=1 // pred_region
      _
    $region25: #{layernorm_net.1} parent=1 // pred_fallthru
      _
    // Predicated region
    $region26: #{layernorm_net.1} parent=1 // pred_check
      _
    $region27: #{layernorm_net.1} parent=1 // pred_check_branch
      %42 = sbr.rel (0) target = $region29
    $region28: #{layernorm_net.1} parent=1 // pred_region
      _
    $region29: #{layernorm_net.1} parent=1 // pred_fallthru
      _
    // Predicated region
    $region30: #{layernorm_net.1} parent=1 // pred_check
      _
    $region31: #{layernorm_net.1} parent=1 // pred_check_branch
      %44 = sbr.rel (0) target = $region33
    $region32: #{layernorm_net.1} parent=1 // pred_region
      _
    $region33: #{layernorm_net.1} parent=1 // pred_fallthru
      _
    // Predicated region
    $region34: #{layernorm_net.1} parent=1 // pred_check
      _
    $region35: #{layernorm_net.1} parent=1 // pred_check_branch
      %46 = sbr.rel (0) target = $region37
    $region36: #{layernorm_net.1} parent=1 // pred_region
      _
    $region37: #{layernorm_net.1} parent=1 // pred_fallthru
      _
    // Predicated region
    $region38: #{layernorm_net.1} parent=1 // pred_check
      _
    $region39: #{layernorm_net.1} parent=1 // pred_check_branch
      %48 = sbr.rel (0) target = $region41
    $region40: #{layernorm_net.1} parent=1 // pred_region
      _
    $region41: #{layernorm_net.1} parent=1 // pred_fallthru
      _
    // Predicated region
    $region42: #{layernorm_net.1} parent=1 // pred_check
      _
    $region43: #{layernorm_net.1} parent=1 // pred_check_branch
      %50 = sbr.rel (0) target = $region45
    $region44: #{layernorm_net.1} parent=1 // pred_region
      _
    $region45: #{layernorm_net.1} parent=1 // pred_fallthru
      _
    // Predicated region
    $region46: #{layernorm_net.1} parent=1 // pred_check
      _
    $region47: #{layernorm_net.1} parent=1 // pred_check_branch
      %52 = sbr.rel (0) target = $region49
    $region48: #{layernorm_net.1} parent=1 // pred_region
      %54 = dma.done [#allocation3], 512
    $region49: #{layernorm_net.1} parent=1 // pred_fallthru
      _
    %v55 = vld [vmem:[%s0] sm:$0xff]
    %v56 = vld [vmem:[#allocation2] sm:$0xff]
    %v57 = vld [vmem:[#allocation2 + $0x8] sm:$0xff]
    %v58 = vld [vmem:[#allocation2 + $0x10] sm:$0xff]
    %v59 = vld [vmem:[#allocation2 + $0x18] sm:$0xff]
    %v60 = vld [vmem:[%s2] sm:$0x1]
    %v62 = vperm.slane %v60, 0
    %vm64 = vcmask 261120
    %v66 = vsel %vm64, %v55, 0
    %68 = vmatpush.msra.mxu0 0.0
    %69 = vmatpush.msra.mxu0 0.0
    %70 = vmatpush.msra.mxu0 0.0
    %71 = vmatpush.msra.mxu0 0.0
    %72 = vmatpush.msra.mxu0 0.0
    %73 = vmatpush.msra.mxu0 0.0
    %74 = vmatpush.msra.mxu0 0.0
    %75 = vmatpush.msra.mxu0 0.0
    %76 = vmatpush.msra.mxu0 0.0
    %77 = vmatpush.msra.mxu0 0.0
    %78 = vmatpush.msra.mxu0 0.0
    %79 = vmatpush.msra.mxu0 0.0
    %80 = vmatpush.msra.mxu0 %v59
    %81 = vmatpush.msra.mxu0 %v58
    %82 = vmatpush.msra.mxu0 %v57
    %83 = vmatpush.msra.mxu0 %v56
    %84 = vmatmul.f32.gmra.mxu0 %v66
    %v85 = vpop.f32.mrf.mxu0
    %v86 = vadd.f32 %v62, %v85
    %87 = vdwg.mxu0
    %v88 = vld [vmem:[%s3] sm:$0x1]
    %v89 = vld [vmem:[%s4] sm:$0x1]
    %vm90 = vcmask 523264
    %v91 = vsel %vm90, %v86, 0.0
    %92 = vadd.xlane.f32.xlu0 %v91
    %v93 = vpop.xlane.xlu0 %92
    %v94 = vmul.f32 %v86, %v86
    %v95 = vsel %vm90, %v94, 0.0
    %96 = vadd.xlane.f32.xlu0 %v95
    %v97 = vpop.xlane.xlu0 %96
    %v98 = vmul.f32 %v93, 0.015625
    %v99 = vmul.f32 %v97, 0.015625
    %v100 = vmul.f32 %v98, %v98
    %v101 = vsub.f32 %v99, %v100
    %v102 = vmax.f32 %v101, 0.0
    %v103 = vsub.f32 %v86, %v98
    %v104 = vadd.f32 %v102, 1e-05
    %v105 = vrsqrt.pop %v104
    %v106 = vmul.f32 %v105, %v104
    %v107 = vmul.f32 %v106, %v105
    %v108 = vmul.f32 0.5, %v107
    %v109 = vsub.f32 1.5, %v108
    %v110 = vmul.f32 %v105, %v109
    %vm111 = vweird.f32 %v104
    %vm112 = vweird.f32 %v105
    %vm113 = vmor %vm111, %vm112
    %v114 = vsel %vm113, %v105, %v110
    %v115 = vmul.f32 %v103, %v114
    %v117 = vperm.slane %v88, 0
    %v119 = vmul.f32 %v115, %v117
    %v121 = vperm.slane %v89, 0
    %v123 = vadd.f32 %v119, %v121
    %v124 = vmax.f32 %v123, 0.0
    %v125 = vld [vmem:[%s5] sm:$0xff]
    %v126 = vld [vmem:[%s5 + $0x8] sm:$0xff]
    %v127 = vld [vmem:[%s5 + $0x10] sm:$0xff]
    %v128 = vld [vmem:[%s5 + $0x18] sm:$0xff]
    %v129 = vld [vmem:[%s5 + $0x20] sm:$0xff]
    %v130 = vld [vmem:[%s5 + $0x28] sm:$0xff]
    %v131 = vld [vmem:[%s5 + $0x30] sm:$0xff]
    %v132 = vld [vmem:[%s5 + $0x38] sm:$0xff]
    %v133 = vld [vmem:[%s6] sm:$0x1]
    %v135 = vperm.slane %v133, 0
    %v138 = vsel %vm90, %v124, 0
    %140 = vmatpush.msra.mxu0 0.0
    %141 = vmatpush.msra.mxu0 0.0
    %142 = vmatpush.msra.mxu0 0.0
    %143 = vmatpush.msra.mxu0 0.0
    %144 = vmatpush.msra.mxu0 0.0
    %145 = vmatpush.msra.mxu0 0.0
    %146 = vmatpush.msra.mxu0 0.0
    %147 = vmatpush.msra.mxu0 0.0
    %148 = vmatpush.msra.mxu0 %v132
    %149 = vmatpush.msra.mxu0 %v131
    %150 = vmatpush.msra.mxu0 %v130
    %151 = vmatpush.msra.mxu0 %v129
    %152 = vmatpush.msra.mxu0 %v128
    %153 = vmatpush.msra.mxu0 %v127
    %154 = vmatpush.msra.mxu0 %v126
    %155 = vmatpush.msra.mxu0 %v125
    %156 = vmatmul.f32.gmra.mxu0 %v138
    %v157 = vpop.f32.mrf.mxu0
    %v158 = vadd.f32 %v135, %v157
    %159 = vdwg.mxu0
    %v160 = vld [vmem:[%s7] sm:$0x1]
    %v161 = vld [vmem:[%s8] sm:$0x1]
    %v162 = vsel %vm90, %v158, 0.0
    %163 = vadd.xlane.f32.xlu0 %v162
    %v164 = vpop.xlane.xlu0 %163
    %v165 = vmul.f32 %v158, %v158
    %v166 = vsel %vm90, %v165, 0.0
    %167 = vadd.xlane.f32.xlu0 %v166
    %v168 = vpop.xlane.xlu0 %167
    %v169 = vmul.f32 %v164, 0.015625
    %v170 = vmul.f32 %v168, 0.015625
    %v171 = vmul.f32 %v169, %v169
    %v172 = vsub.f32 %v170, %v171
    %v173 = vmax.f32 %v172, 0.0
    %v174 = vsub.f32 %v158, %v169
    %v175 = vadd.f32 %v173, 1e-05
    %v176 = vrsqrt.pop %v175
    %v177 = vmul.f32 %v176, %v175
    %v178 = vmul.f32 %v177, %v176
    %v179 = vmul.f32 0.5, %v178
    %v180 = vsub.f32 1.5, %v179
    %v181 = vmul.f32 %v176, %v180
    %vm182 = vweird.f32 %v175
    %vm183 = vweird.f32 %v176
    %vm184 = vmor %vm182, %vm183
    %v185 = vsel %vm184, %v176, %v181
    %v186 = vmul.f32 %v174, %v185
    %v188 = vperm.slane %v160, 0
    %v190 = vmul.f32 %v186, %v188
    %v192 = vperm.slane %v161, 0
    %v194 = vadd.f32 %v190, %v192
    %v195 = vmax.f32 %v194, 0.0
    %v196 = vld [vmem:[%s9] sm:$0xff]
    %v197 = vld [vmem:[%s9 + $0x8] sm:$0xff]
    %v198 = vld [vmem:[%s9 + $0x10] sm:$0xff]
    %v199 = vld [vmem:[%s9 + $0x18] sm:$0xff]
    %v200 = vld [vmem:[%s9 + $0x20] sm:$0xff]
    %v201 = vld [vmem:[%s9 + $0x28] sm:$0xff]
    %v202 = vld [vmem:[%s9 + $0x30] sm:$0xff]
    %v203 = vld [vmem:[%s9 + $0x38] sm:$0xff]
    %v204 = vld [vmem:[%s10] sm:$0x1]
    %v206 = vperm.slane %v204, 0
    %v209 = vsel %vm90, %v195, 0
    %211 = vmatpush.msra.mxu0 0.0
    %212 = vmatpush.msra.mxu0 0.0
    %213 = vmatpush.msra.mxu0 0.0
    %214 = vmatpush.msra.mxu0 0.0
    %215 = vmatpush.msra.mxu0 0.0
    %216 = vmatpush.msra.mxu0 0.0
    %217 = vmatpush.msra.mxu0 0.0
    %218 = vmatpush.msra.mxu0 0.0
    %219 = vmatpush.msra.mxu0 %v203
    %220 = vmatpush.msra.mxu0 %v202
    %221 = vmatpush.msra.mxu0 %v201
    %222 = vmatpush.msra.mxu0 %v200
    %223 = vmatpush.msra.mxu0 %v199
    %224 = vmatpush.msra.mxu0 %v198
    %225 = vmatpush.msra.mxu0 %v197
    %226 = vmatpush.msra.mxu0 %v196
    %227 = vmatmul.f32.gmra.mxu0 %v209
    %v228 = vpop.f32.mrf.mxu0
    %v229 = vadd.f32 %v206, %v228
    %230 = vdwg.mxu0
    %vm231 = vcmask 130048
    %232 = vst.msk [vmem:[#allocation5] sm:$0xff] %vm231, %v229
    // Predicated region
    $region50: #{layernorm_net.1} parent=1 // pred_check
      _
    $region51: #{layernorm_net.1} parent=1 // pred_check_branch
      %234 = sbr.rel (0) target = $region53
    $region52: #{layernorm_net.1} parent=1 // pred_region
      %236 = vsyncadd [#allocation4], 0
      %s238 = sshll.u32 [#allocation5], 4
      %s239 = int_to_ptr.vmem [resolvable:$true] %s238
      %s240 = sshll.u32 %s11, 4
      %s241 = int_to_ptr.hbm [resolvable:$true] %s240
      %243 = dma.vmem_to_hbm [thread:$0]  %s239, 128, %s241, [#allocation4]
    $region53: #{layernorm_net.1} parent=1 // pred_fallthru
      _
    // Predicated region
    $region54: #{layernorm_net.1} parent=1 // pred_check
      _
    $region55: #{layernorm_net.1} parent=1 // pred_check_branch
      %245 = sbr.rel (0) target = $region57
    $region56: #{layernorm_net.1} parent=1 // pred_region
      %247 = dma.done [#allocation4], 128
    $region57: #{layernorm_net.1} parent=1 // pred_fallthru
      _
    %248 = vsyncpa [#allocation3], 1
    %249 = vsyncpa [#allocation4], 1

</llo_original>
